<compile_context>
chip_gen: v7x
topology: tpu7x:2x2x1
jax: 0.10.0
libtpu: 0.0.40
codegen_flags: <defaults>
</compile_context>

<pallas_src>
import functools
import math

import jax
import jax.numpy as jnp
from jax.experimental import pallas as pl
from jax.experimental.pallas import tpu as pltpu


def _make_split_kernel(chunks):
    """chunks: tuple of (start, size) along the middle axis of the 3-D view."""

    def kernel(x_ref, *out_refs):
        # Pure data movement: static slices of the VMEM-resident input tile.
        for (start, size), o_ref in zip(chunks, out_refs):
            o_ref[...] = x_ref[:, start:start + size, :]

    return kernel


def _choose_inner_tile(inner: int) -> int:
    """Lane-dense tiling of the trailing axis (multiple of 128 when possible)."""
    if inner <= 1024 or inner % 128 != 0:
        return inner  # full-extent block: no (8,128) constraint applies
    for cand in (1024, 512, 256, 128):
        if inner % cand == 0:
            return cand
    return inner


def _choose_outer_tile(outer: int, dim: int, t_inner: int, itemsize: int,
                       budget_bytes: int = 2 << 20) -> int:
    """Keep the per-step input block ~2 MiB so the double-buffered footprint
    (input + all chunk outputs) stays far below the scoped-VMEM limit
    (32 MiB default; 64 MiB physical on v7x)."""
    max_rows = max(1, budget_bytes // max(1, dim * t_inner * itemsize))
    t_outer = min(outer, max_rows)
    while outer % t_outer != 0:  # prefer an exact divisor of `outer`
        t_outer -= 1
    return t_outer


@functools.partial(jax.jit, static_argnames=("split_size", "axis"))
def pallas_split(x, split_size: int, axis: int):
    """Equivalent of torch.split(x, split_size, axis) as one Pallas TPU kernel."""
    ndim = x.ndim
    axis = axis % ndim
    dim = x.shape[axis]

    # Collapse to (outer, dim, inner): isolates the split axis and makes the
    # last (lane) axis as wide as possible.
    outer = math.prod(x.shape[:axis]) if axis > 0 else 1
    inner = math.prod(x.shape[axis + 1:]) if axis < ndim - 1 else 1
    x3 = x.reshape(outer, dim, inner)

    # torch.split semantics: chunks of `split_size`, last one may be smaller.
    chunks = tuple((s, min(split_size, dim - s)) for s in range(0, dim, split_size))

    t_inner = _choose_inner_tile(inner)
    t_outer = _choose_outer_tile(outer, dim, t_inner, x.dtype.itemsize)
    grid = (outer // t_outer, inner // t_inner)

    idx_map = lambda i, j: (i, 0, j)  # same tile offsets for input and outputs

    in_spec = pl.BlockSpec((t_outer, dim, t_inner), idx_map)
    out_specs = tuple(
        pl.BlockSpec((t_outer, size, t_inner), idx_map) for _, size in chunks
    )
    out_shapes = tuple(
        jax.ShapeDtypeStruct((outer, size, inner), x.dtype) for _, size in chunks
    )

    raw_outs = pl.pallas_call(
        _make_split_kernel(chunks),
        out_shape=out_shapes,
        grid=grid,
        in_specs=[in_spec],
        out_specs=out_specs,
        compiler_params=pltpu.CompilerParams(
            dimension_semantics=("parallel", "parallel"),
        ),
    )(x3)

    # Restore the original layout for each chunk (wrapper-side reshape only).
    outs = []
    for (_, size), o3 in zip(chunks, raw_outs):
        shp = list(x.shape)
        shp[axis] = size
        outs.append(o3.reshape(tuple(shp)))
    return tuple(outs)


class SplitPallas:
    """Mirror of the PyTorch module; no parameters."""

    def __init__(self, axis: int, num_outputs: int):
        self.axis = axis
        self.num_outputs = num_outputs  # chunk size, per torch.split semantics

    def __call__(self, x):
        return pallas_split(x, self.num_outputs, self.axis)


if __name__ == "__main__":
    key = jax.random.PRNGKey(0)
    # Small NCHW input consistent with the module's forward.
    x = jax.random.normal(key, (2, 4, 16, 16), dtype=jnp.float32)

    # Split along channel axis into chunks of size 2 -> two (2, 2, 16, 16) outputs.
    mod = SplitPallas(axis=1, num_outputs=2)
    outs = mod(x)
    outs = jax.block_until_ready(outs)

    # Reference check against plain JAX slicing (torch.split semantics).
    ref = []
    dim = x.shape[1]
    for s in range(0, dim, 2):
        ref.append(x[:, s:s + min(2, dim - s), :, :])

    assert len(outs) == len(ref)
    for o, r in zip(outs, ref):
        assert o.shape == r.shape and o.dtype == r.dtype
        assert jnp.allclose(o, r), "mismatch vs reference split"

    print("KERNEL_OK")
</pallas_src>

<mosaic_0001>
module attributes {stable_mosaic.version = 11 : i64} {
  func.func @kernel(%arg0: i32, %arg1: i32, %arg2: memref<2x4x256xf32, #tpu.memory_space<vmem>>, %arg3: memref<2x2x256xf32, #tpu.memory_space<vmem>>, %arg4: memref<2x2x256xf32, #tpu.memory_space<vmem>>) attributes {dimension_semantics = [#tpu.dimension_semantics<parallel>, #tpu.dimension_semantics<parallel>], iteration_bounds = array<i64: 1, 1>, scalar_prefetch = 0 : i64, scratch_operands = 0 : i64, tpu.core_type = #tpu.core_type<tc>, window_params = [{transform_indices = @transform_0, window_bounds = array<i64: 2, 4, 256>}, {transform_indices = @transform_1, window_bounds = array<i64: 2, 2, 256>}, {transform_indices = @transform_2, window_bounds = array<i64: 2, 2, 256>}]} {
    %c0 = arith.constant 0 : index
    %c0_0 = arith.constant 0 : index
    %c0_1 = arith.constant 0 : index
    %0 = vector.load %arg2[%c0, %c0_0, %c0_1] : memref<2x4x256xf32, #tpu.memory_space<vmem>>, vector<2x2x256xf32>
    %c0_2 = arith.constant 0 : index
    %c0_3 = arith.constant 0 : index
    %c0_4 = arith.constant 0 : index
    %1 = vector.load %arg3[%c0_2, %c0_3, %c0_4] : memref<2x2x256xf32, #tpu.memory_space<vmem>>, vector<2x2x256xf32>
    tpu.vector_store %arg3[%c0_2, %c0_3, %c0_4], %0 {strides = array<i32>} : memref<2x2x256xf32, #tpu.memory_space<vmem>>, vector<2x2x256xf32>,
    %c0_5 = arith.constant 0 : index
    %c2 = arith.constant 2 : index
    %c0_6 = arith.constant 0 : index
    %2 = vector.load %arg2[%c0_5, %c2, %c0_6] : memref<2x4x256xf32, #tpu.memory_space<vmem>>, vector<2x2x256xf32>
    %c0_7 = arith.constant 0 : index
    %c0_8 = arith.constant 0 : index
    %c0_9 = arith.constant 0 : index
    %3 = vector.load %arg4[%c0_7, %c0_8, %c0_9] : memref<2x2x256xf32, #tpu.memory_space<vmem>>, vector<2x2x256xf32>
    tpu.vector_store %arg4[%c0_7, %c0_8, %c0_9], %2 {strides = array<i32>} : memref<2x2x256xf32, #tpu.memory_space<vmem>>, vector<2x2x256xf32>,
    return
  }
  func.func @transform_0(%arg0: i32, %arg1: i32) -> (i32, i32, i32) {
    %c0_i32 = arith.constant 0 : i32
    %c0_i32_0 = arith.constant 0 : i32
    return %arg0, %c0_i32, %arg1 : i32, i32, i32
  }
  func.func @transform_1(%arg0: i32, %arg1: i32) -> (i32, i32, i32) {
    %c0_i32 = arith.constant 0 : i32
    %c0_i32_0 = arith.constant 0 : i32
    return %arg0, %c0_i32, %arg1 : i32, i32, i32
  }
  func.func @transform_2(%arg0: i32, %arg1: i32) -> (i32, i32, i32) {
    %c0_i32 = arith.constant 0 : i32
    %c0_i32_0 = arith.constant 0 : i32
    return %arg0, %c0_i32, %arg1 : i32, i32, i32
  }
}

</mosaic_0001>

<llo_original>
// kernel: pallas_split.1
$region0: #{pallas_split.1}
  #allocation0 [shape = 'u32[]', space=smem, size = 0x4, offset = 0x4, fixed_abs, tag = 'smem constant byte address 0x4 - core index']
  #allocation1 [shape = 'u32[144,128]{1,0:T(1,128)}', space=vmem, size = 0x12000, scoped, tag = 'internal scratch']
  %s0 = inlined_call_operand.vmem [shape: f32[2,4,256], index: 0, kind: input, shape index: {}]
  %s1 = inlined_call_operand.vmem [shape: f32[2,2,256], index: 1, kind: output, shape index: {0}]
  %s2 = inlined_call_operand.vmem [shape: f32[2,2,256], index: 2, kind: output, shape index: {1}]
  %3 = xla_tuple %s1, %s2
  %s4 = sld [smem:[#allocation0]]
  $region22: #{pallas_split.1} parent=0
    _
  %s6 = ssub.s32 1, %s4
  %s7 = scalar_select 0, %s6, %s4
  // Predicated region
  $region2: #{pallas_split.1} parent=0 // pred_check
    _
  $region3: #{pallas_split.1} parent=0 // pred_check_branch
    %9 = sbr.rel (0) target = $region5
  $region4: #{pallas_split.1} parent=0 // pred_region
    _
  $region5: #{pallas_split.1} parent=0 // pred_fallthru
    _
  %v10 = vld [vmem:[%s0] sm:$0x33]
  %v11 = vld [vmem:[%s0 + $0x8] sm:$0x33]
  %v15 = vunpack.c.l.s4 1983009808
  %v16 = vunpack.c.0.s8 %v15
  %v17 = vlaneseq
  %v18 = vshrl.u32 %v17, 7
  %v19 = vsub.s32 %v16, %v18
  %v20 = vrot.slane %v10, %v19
  %v22 = vunpack.c.l.s4 1983009808
  %v23 = vunpack.c.0.s8 %v22
  %v24 = vlaneseq
  %v25 = vshrl.u32 %v24, 7
  %v26 = vsub.s32 %v23, %v25
  %v27 = vrot.slane %v11, %v26
  %30 = vst [vmem:[%s1] sm:$0xf] %v20
  %31 = vst [vmem:[%s1 + $0x4] sm:$0xf] %v27
  %v32 = vld [vmem:[%s0] sm:$0xcc]
  %v33 = vld [vmem:[%s0 + $0x8] sm:$0xcc]
  %v37 = vunpack.c.l.s4 1983009808
  %v38 = vunpack.c.0.s8 %v37
  %v39 = vlaneseq
  %v40 = vshrl.u32 %v39, 7
  %v41 = vsub.s32 %v38, %v40
  %v42 = vrot.slane %v32, %v41
  %v43 = vcombine.high %v42, %v42
  %v45 = vunpack.c.l.s4 1983009808
  %v46 = vunpack.c.0.s8 %v45
  %v47 = vlaneseq
  %v48 = vshrl.u32 %v47, 7
  %v49 = vsub.s32 %v46, %v48
  %v50 = vrot.slane %v33, %v49
  %v51 = vcombine.high %v50, %v50
  %54 = vst [vmem:[%s2] sm:$0xf] %v43
  %55 = vst [vmem:[%s2 + $0x4] sm:$0xf] %v51
  // Predicated region
  $region6: #{pallas_split.1} parent=0 // pred_check
    _
  $region7: #{pallas_split.1} parent=0 // pred_check_branch
    %57 = sbr.rel (0) target = $region9
  $region8: #{pallas_split.1} parent=0 // pred_region
    _
  $region9: #{pallas_split.1} parent=0 // pred_fallthru
    _
  // Predicated region
  $region10: #{pallas_split.1} parent=0 // pred_check
    _
  $region11: #{pallas_split.1} parent=0 // pred_check_branch
    %59 = sbr.rel (0) target = $region13
  $region12: #{pallas_split.1} parent=0 // pred_region
    _
  $region13: #{pallas_split.1} parent=0 // pred_fallthru
    _
  // Predicated region
  $region14: #{pallas_split.1} parent=0 // pred_check
    _
  $region15: #{pallas_split.1} parent=0 // pred_check_branch
    %61 = sbr.rel (0) target = $region17
  $region16: #{pallas_split.1} parent=0 // pred_region
    _
  $region17: #{pallas_split.1} parent=0 // pred_fallthru
    _
  // Predicated region
  $region18: #{pallas_split.1} parent=0 // pred_check
    _
  $region19: #{pallas_split.1} parent=0 // pred_check_branch
    %63 = sbr.rel (0) target = $region21
  $region20: #{pallas_split.1} parent=0 // pred_region
    _
  $region21: #{pallas_split.1} parent=0 // pred_fallthru
    _

</llo_original>
